<compile_context>
chip_gen: v5e
topology: v5e:2x2
jax: 0.10.0
libtpu: 0.0.40
codegen_flags: <defaults>
</compile_context>

<pallas_src>
import functools
import math

import jax
import jax.numpy as jnp
from jax.experimental import pallas as pl
from jax.experimental.pallas import tpu as pltpu


def _vmem_capacity_bytes():
    """Physical VMEM of the current chip generation (fallback: v7x per-TC)."""
    try:
        cap = int(pltpu.get_tpu_info().vmem_capacity_bytes)
        if cap > 0:
            return cap
    except Exception:
        pass
    return 64 << 20  # conservative: v7x has 64 MiB per TensorCore


def _divisor_blocks(total, quantum, cap):
    """Block sizes of `total` (descending): divisors that are multiples of
    `quantum`, capped at `cap`; always contains at least the full dim."""
    cands = []
    if total <= cap:
        cands.append(total)
    b = (min(total, cap) // quantum) * quantum
    while b >= quantum:
        if total % b == 0 and b != total:
            cands.append(b)
        b -= quantum
    if not cands:
        cands.append(total)
    return cands


def _choose_tiles(B, H, Tq, Tk, D, Dv, in_isz, out_isz, has_mask, return_attn,
                  budget, block_h=None, block_q=None, block_k=None):
    """Pick (block_h, block_q, block_k) so the double-buffered block footprint
    plus f32 temporaries fits `budget`.  Preference: keep heads batched and q
    tiles big, shrink the Tk tile first (review: k/v residency is the lever)."""

    bh_cands = [block_h] if block_h else \
        [d for d in range(min(H, 8), 0, -1) if H % d == 0]
    bq_cands = [block_q] if block_q else _divisor_blocks(Tq, 8, 512)
    bk_cands = [block_k] if block_k else _divisor_blocks(Tk, 128, 2048)

    def footprint(bh, bq, bk, nk):
        blocks = ((B * bh * bq * D + B * bh * bk * D + B * bh * bk * Dv) * in_isz
                  + (bq * bk if has_mask else 0)              # int8 mask
                  + B * bh * bq * Dv * out_isz
                  + (B * bh * bq * bk * out_isz if return_attn else 0))
        scratch = B * bh * bq * Dv * 4 if nk > 1 else 0        # f32 accumulator
        temps = 4 * B * bq * bk * 4                            # per-head f32 score temps
        return 2 * blocks + scratch + temps

    best = None
    for bh in bh_cands:            # prefer many heads per step
        for bq in bq_cands:        # then big q tiles
            for bk in bk_cands:    # shrink Tk tile first
                nk = Tk // bk
                fp = footprint(bh, bq, bk, nk)
                if best is None or fp < best[0]:
                    best = (fp, bh, bq, bk)
                if fp <= budget:
                    return bh, bq, bk, fp
    # Nothing fits (e.g. huge B with a whole-batch softmax): return the
    # smallest-footprint candidate rather than silently clamping.
    return best[1], best[2], best[3], best[0]


def _make_kernel(*, block_h, has_mask, has_attn, has_acc, scale, d_k,
                 approx_recip):
    def kernel(*refs):
        it = iter(refs)
        q_ref = next(it)                          # (B, bh, bq, D)
        k_ref = next(it)                          # (B, bh, bk, D)
        v_ref = next(it)                          # (B, bh, bk, Dv)
        m_ref = next(it) if has_mask else None    # (bq, bk) int8
        out_ref = next(it)                        # (B, bh, bq, Dv)
        attn_ref = next(it) if has_attn else None  # (B, bh, bq, bk)
        acc_ref = next(it) if has_acc else None   # (B, bh, bq, Dv) f32 scratch

        if has_acc:
            kk = pl.program_id(2)

            @pl.when(kk == 0)
            def _():
                acc_ref[...] = jnp.zeros_like(acc_ref)

        inv_sqrt_d = jnp.float32(1.0 / math.sqrt(d_k))
        # Hoist the mask compare out of the per-head loop (int8 -> bool once).
        masked = (m_ref[...] != 0) if has_mask else None       # (bq, bk)

        for hh in range(block_h):
            qh = q_ref[:, hh]                     # (B, bq, D), native dtype
            kh = k_ref[:, hh]                     # (B, bk, D)
            vh = v_ref[:, hh]                     # (B, bk, Dv)

            # Q @ K^T on the MXU in the native dtype, f32 accumulation.
            s = jnp.einsum("bqd,bkd->bqk", qh, kh,
                           preferred_element_type=jnp.float32)
            if scale:
                # Scale the f32 scores (same op order as the reference; safe
                # for bf16 inputs too).
                s = s * inv_sqrt_d
            if has_mask:
                # masked_fill semantics; compare+select (not additive) is
                # required for the dim=0 softmax to reproduce the uniform 1/B
                # masked entries.
                s = jnp.where(masked[None], jnp.float32(-1000000000.0), s)

            # Softmax over the BATCH axis (nn.Softmax(dim=0)); element-wise in
            # Tk, so every Tk tile's probabilities are final.
            mx = jnp.max(s, axis=0, keepdims=True)
            e = jnp.exp(s - mx)
            den = jnp.sum(e, axis=0, keepdims=True)
            if approx_recip:
                p = e * pl.reciprocal(den, approx=True)
            else:
                p = e / den

            if has_attn:
                attn_ref[:, hh] = p.astype(attn_ref.dtype)

            pv = jnp.einsum("bqk,bkd->bqd", p.astype(vh.dtype), vh,
                            preferred_element_type=jnp.float32)
            if has_acc:
                acc_ref[:, hh] += pv
            else:
                out_ref[:, hh] = pv.astype(out_ref.dtype)

        if has_acc:
            @pl.when(kk == pl.num_programs(2) - 1)
            def _():
                out_ref[...] = acc_ref[...].astype(out_ref.dtype)

    return kernel


def scaled_dot_product_attention(q, k, v, mask=None, scale=True,
                                 return_attn=True, approx_recip=False,
                                 block_h=None, block_q=None, block_k=None):
    """Pallas implementation of ScaledDotProductAttention.forward.

    q: (B, H, Tq, D), k: (B, H, Tk, D), v: (B, H, Tk, Dv)
    mask: None or (Tq, Tk) / (1, Tq, Tk); nonzero entries masked out
          (the torch code tiles it over B*H -- here it is simply broadcast).
    Returns (output, attn) if return_attn else output.
    """
    B, H, Tq, D = q.shape
    Tk = k.shape[2]
    Dv = v.shape[3]
    out_dtype = q.dtype
    has_mask = mask is not None

    in_isz = jnp.dtype(q.dtype).itemsize
    out_isz = jnp.dtype(out_dtype).itemsize

    # Generation-aware budget (v7x: 64 MiB per TC, v5e/v6e: 128 MiB).
    cap = _vmem_capacity_bytes()
    budget = int(cap * 0.78)

    bh, bq, bk, fp = _choose_tiles(B, H, Tq, Tk, D, Dv, in_isz, out_isz,
                                   has_mask, return_attn, budget,
                                   block_h=block_h, block_q=block_q,
                                   block_k=block_k)
    assert H % bh == 0 and Tq % bq == 0 and Tk % bk == 0
    n_h, n_q, n_k = H // bh, Tq // bq, Tk // bk
    has_acc = n_k > 1
    grid = (n_h, n_q, n_k)   # Tk innermost -> q block not re-DMA'd across it

    in_specs = [
        pl.BlockSpec((B, bh, bq, D), lambda h, i, kk: (0, h, i, 0)),   # q
        pl.BlockSpec((B, bh, bk, D), lambda h, i, kk: (0, h, kk, 0)),  # k
        pl.BlockSpec((B, bh, bk, Dv), lambda h, i, kk: (0, h, kk, 0)),  # v
    ]
    operands = [q, k, v]
    if has_mask:
        mask_arr = jnp.asarray(mask).reshape(Tq, Tk).astype(jnp.int8)
        in_specs.append(pl.BlockSpec((bq, bk), lambda h, i, kk: (i, kk)))
        operands.append(mask_arr)

    out_specs = [pl.BlockSpec((B, bh, bq, Dv), lambda h, i, kk: (0, h, i, 0))]
    out_shapes = [jax.ShapeDtypeStruct((B, H, Tq, Dv), out_dtype)]
    if return_attn:
        out_specs.append(
            pl.BlockSpec((B, bh, bq, bk), lambda h, i, kk: (0, h, i, kk)))
        out_shapes.append(jax.ShapeDtypeStruct((B, H, Tq, Tk), out_dtype))

    scratch_shapes = []
    if has_acc:
        scratch_shapes.append(pltpu.VMEM((B, bh, bq, Dv), jnp.float32))

    # VMEM limit from the real footprint (+slack), capped under the chip's
    # physical VMEM instead of a fixed clamp.
    vmem_limit = max(32 << 20, min(fp + (4 << 20), int(cap * 0.9)))

    kernel = _make_kernel(block_h=bh, has_mask=has_mask, has_attn=return_attn,
                          has_acc=has_acc, scale=scale, d_k=D,
                          approx_recip=approx_recip)

    results = pl.pallas_call(
        kernel,
        out_shape=tuple(out_shapes),
        grid_spec=pltpu.PrefetchScalarGridSpec(
            num_scalar_prefetch=0,
            grid=grid,
            in_specs=in_specs,
            out_specs=out_specs,
            scratch_shapes=scratch_shapes,
        ),
        compiler_params=pltpu.CompilerParams(
            dimension_semantics=("parallel", "parallel", "arbitrary"),
            vmem_limit_bytes=vmem_limit,
        ),
    )(*operands)

    if return_attn:
        out, attn = results
        return out, attn
    (out,) = results
    return out


def _reference(q, k, v, mask=None, scale=True):
    """Pure-JAX transcription of the torch forward (incl. softmax over dim=0)."""
    qf = q.astype(jnp.float32)
    kf = k.astype(jnp.float32)
    vf = v.astype(jnp.float32)
    attn = jnp.einsum("bhqd,bhkd->bhqk", qf, kf)
    if scale:
        attn = attn / jnp.sqrt(jnp.float32(k.shape[-1]))
    if mask is not None:
        Tq, Tk = attn.shape[2], attn.shape[3]
        m = jnp.broadcast_to(
            jnp.asarray(mask).reshape(1, 1, Tq, Tk).astype(bool), attn.shape)
        attn = jnp.where(m, -1000000000.0, attn)
    attn = jax.nn.softmax(attn, axis=0)  # dim=0 !
    out = jnp.einsum("bhqk,bhkd->bhqd", attn, vf)
    return out.astype(q.dtype), attn.astype(q.dtype)


if __name__ == "__main__":
    key = jax.random.PRNGKey(0)

    # --- test 1: small TFT-like shape, no mask and masked, attn returned ---
    B, H, Tq, Tk, D, Dv = 2, 4, 8, 8, 32, 32
    kq, kk_, kv = jax.random.split(key, 3)
    q = jax.random.normal(kq, (B, H, Tq, D), jnp.float32)
    k = jax.random.normal(kk_, (B, H, Tk, D), jnp.float32)
    v = jax.random.normal(kv, (B, H, Tk, Dv), jnp.float32)

    out, attn = scaled_dot_product_attention(q, k, v, mask=None, scale=True)
    out = jax.block_until_ready(out)
    attn = jax.block_until_ready(attn)
    ref_out, ref_attn = _reference(q, k, v, mask=None, scale=True)
    assert jnp.allclose(out, ref_out, atol=2e-5, rtol=2e-5)
    assert jnp.allclose(attn, ref_attn, atol=2e-5, rtol=2e-5)

    mask = (jnp.arange(Tk)[None, :] > jnp.arange(Tq)[:, None]).astype(jnp.int32)
    mask = mask.reshape(1, Tq, Tk)
    out_m, attn_m = scaled_dot_product_attention(q, k, v, mask=mask, scale=True)
    out_m = jax.block_until_ready(out_m)
    attn_m = jax.block_until_ready(attn_m)
    ref_out_m, ref_attn_m = _reference(q, k, v, mask=mask, scale=True)
    assert jnp.allclose(out_m, ref_out_m, atol=2e-5, rtol=2e-5)
    assert jnp.allclose(attn_m, ref_attn_m, atol=2e-5, rtol=2e-5)

    # --- test 2: output-only path (attn writeback dropped) ---
    out_only = scaled_dot_product_attention(q, k, v, mask=mask, scale=True,
                                            return_attn=False)
    out_only = jax.block_until_ready(out_only)
    assert jnp.allclose(out_only, ref_out_m, atol=2e-5, rtol=2e-5)

    # --- test 3: force q/k tiling (exercises the Tk accumulator path) ---
    B2, H2, T2, D2 = 2, 4, 256, 32
    kq2, kk2, kv2 = jax.random.split(jax.random.PRNGKey(1), 3)
    q2 = jax.random.normal(kq2, (B2, H2, T2, D2), jnp.float32)
    k2 = jax.random.normal(kk2, (B2, H2, T2, D2), jnp.float32)
    v2 = jax.random.normal(kv2, (B2, H2, T2, D2), jnp.float32)
    mask2 = (jnp.arange(T2)[None, :] > jnp.arange(T2)[:, None]).astype(jnp.int32)
    out2, attn2 = scaled_dot_product_attention(q2, k2, v2, mask=mask2,
                                               scale=True, block_q=128,
                                               block_k=128)
    out2 = jax.block_until_ready(out2)
    attn2 = jax.block_until_ready(attn2)
    ref_out2, ref_attn2 = _reference(q2, k2, v2, mask=mask2, scale=True)
    assert jnp.allclose(out2, ref_out2, atol=2e-4, rtol=2e-4)
    assert jnp.allclose(attn2, ref_attn2, atol=2e-5, rtol=2e-5)

    print("KERNEL_OK")
</pallas_src>

<mosaic_0001>
module attributes {stable_mosaic.version = 11 : i64} {
  func.func @kernel(%arg0: i32, %arg1: i32, %arg2: i32, %arg3: memref<2x4x8x32xf32, #tpu.memory_space<vmem>>, %arg4: memref<2x4x8x32xf32, #tpu.memory_space<vmem>>, %arg5: memref<2x4x8x32xf32, #tpu.memory_space<vmem>>, %arg6: memref<2x4x8x32xf32, #tpu.memory_space<vmem>>, %arg7: memref<2x4x8x8xf32, #tpu.memory_space<vmem>>) attributes {dimension_semantics = [#tpu.dimension_semantics<parallel>, #tpu.dimension_semantics<parallel>, #tpu.dimension_semantics<arbitrary>], iteration_bounds = array<i64: 1, 1, 1>, scalar_prefetch = 0 : i64, scratch_operands = 0 : i64, tpu.core_type = #tpu.core_type<tc>, window_params = [{transform_indices = @transform_0, window_bounds = array<i64: 2, 4, 8, 32>}, {transform_indices = @transform_1, window_bounds = array<i64: 2, 4, 8, 32>}, {transform_indices = @transform_2, window_bounds = array<i64: 2, 4, 8, 32>}, {transform_indices = @transform_3, window_bounds = array<i64: 2, 4, 8, 32>}, {transform_indices = @transform_4, window_bounds = array<i64: 2, 4, 8, 8>}]} {
    %c0 = arith.constant 0 : index
    %c0_0 = arith.constant 0 : index
    %c0_1 = arith.constant 0 : index
    %c0_2 = arith.constant 0 : index
    %0 = vector.load %arg3[%c0, %c0_0, %c0_1, %c0_2] : memref<2x4x8x32xf32, #tpu.memory_space<vmem>>, vector<2x1x8x32xf32>
    %1 = vector.shape_cast %0 : vector<2x1x8x32xf32> to vector<2x8x32xf32>
    %c0_3 = arith.constant 0 : index
    %c0_4 = arith.constant 0 : index
    %c0_5 = arith.constant 0 : index
    %c0_6 = arith.constant 0 : index
    %2 = vector.load %arg4[%c0_3, %c0_4, %c0_5, %c0_6] : memref<2x4x8x32xf32, #tpu.memory_space<vmem>>, vector<2x1x8x32xf32>
    %3 = vector.shape_cast %2 : vector<2x1x8x32xf32> to vector<2x8x32xf32>
    %c0_7 = arith.constant 0 : index
    %c0_8 = arith.constant 0 : index
    %c0_9 = arith.constant 0 : index
    %c0_10 = arith.constant 0 : index
    %4 = vector.load %arg5[%c0_7, %c0_8, %c0_9, %c0_10] : memref<2x4x8x32xf32, #tpu.memory_space<vmem>>, vector<2x1x8x32xf32>
    %5 = vector.shape_cast %4 : vector<2x1x8x32xf32> to vector<2x8x32xf32>
    "tpu.trace_start"() <{level = 10 : i32, message = "bqd,bkd->bqk"}> : () -> ()
    %cst = arith.constant dense<0.000000e+00> : vector<2x8x8xf32>
    %6 = tpu.matmul %1, %3, %cst {dimension_numbers = #tpu.dot_dimension_numbers<[2], [2], [1], [1], [0, 0, 0, 1, 1, 1], [0], [0]>} : vector<2x8x32xf32>, vector<2x8x32xf32>, vector<2x8x8xf32> -> vector<2x8x8xf32>
    "tpu.trace_stop"() : () -> ()
    %cst_11 = arith.constant 0.176776692 : f32
    %7 = vector.broadcast %cst_11 : f32 to vector<2x8x8xf32>
    %8 = arith.mulf %6, %7 : vector<2x8x8xf32>
    %cst_12 = arith.constant dense<0xFF800000> : vector<8x8xf32>
    %9 = vector.multi_reduction <maximumf>, %8, %cst_12 [0] : vector<2x8x8xf32> to vector<8x8xf32>
    %10 = vector.shape_cast %9 : vector<8x8xf32> to vector<1x8x8xf32>
    %11 = vector.broadcast %10 : vector<1x8x8xf32> to vector<2x8x8xf32>
    %12 = arith.subf %8, %11 : vector<2x8x8xf32>
    %13 = math.exp %12 : vector<2x8x8xf32>
    %cst_13 = arith.constant dense<0.000000e+00> : vector<8x8xf32>
    %14 = vector.multi_reduction <add>, %13, %cst_13 [0] : vector<2x8x8xf32> to vector<8x8xf32>
    %15 = vector.shape_cast %14 : vector<8x8xf32> to vector<1x8x8xf32>
    %16 = vector.broadcast %15 : vector<1x8x8xf32> to vector<2x8x8xf32>
    %17 = arith.divf %13, %16 : vector<2x8x8xf32>
    %c0_14 = arith.constant 0 : index
    %c0_15 = arith.constant 0 : index
    %c0_16 = arith.constant 0 : index
    %c0_17 = arith.constant 0 : index
    %18 = vector.load %arg7[%c0_14, %c0_15, %c0_16, %c0_17] : memref<2x4x8x8xf32, #tpu.memory_space<vmem>>, vector<2x1x8x8xf32>
    %19 = vector.shape_cast %18 : vector<2x1x8x8xf32> to vector<2x8x8xf32>
    %20 = vector.shape_cast %17 : vector<2x8x8xf32> to vector<2x1x8x8xf32>
    tpu.vector_store %arg7[%c0_14, %c0_15, %c0_16, %c0_17], %20 {strides = array<i32>} : memref<2x4x8x8xf32, #tpu.memory_space<vmem>>, vector<2x1x8x8xf32>,
    "tpu.trace_start"() <{level = 10 : i32, message = "bqk,bkd->bqd"}> : () -> ()
    %cst_18 = arith.constant dense<0.000000e+00> : vector<2x8x32xf32>
    %21 = tpu.matmul %17, %5, %cst_18 {dimension_numbers = #tpu.dot_dimension_numbers<[2], [1], [1], [2], [0, 0, 0, 1, 1, 2], [0], [0]>} : vector<2x8x8xf32>, vector<2x8x32xf32>, vector<2x8x32xf32> -> vector<2x8x32xf32>
    "tpu.trace_stop"() : () -> ()
    %c0_19 = arith.constant 0 : index
    %c0_20 = arith.constant 0 : index
    %c0_21 = arith.constant 0 : index
    %c0_22 = arith.constant 0 : index
    %22 = vector.load %arg6[%c0_19, %c0_20, %c0_21, %c0_22] : memref<2x4x8x32xf32, #tpu.memory_space<vmem>>, vector<2x1x8x32xf32>
    %23 = vector.shape_cast %22 : vector<2x1x8x32xf32> to vector<2x8x32xf32>
    %24 = vector.shape_cast %21 : vector<2x8x32xf32> to vector<2x1x8x32xf32>
    tpu.vector_store %arg6[%c0_19, %c0_20, %c0_21, %c0_22], %24 {strides = array<i32>} : memref<2x4x8x32xf32, #tpu.memory_space<vmem>>, vector<2x1x8x32xf32>,
    %c0_23 = arith.constant 0 : index
    %c1 = arith.constant 1 : index
    %c0_24 = arith.constant 0 : index
    %c0_25 = arith.constant 0 : index
    %25 = vector.load %arg3[%c0_23, %c1, %c0_24, %c0_25] : memref<2x4x8x32xf32, #tpu.memory_space<vmem>>, vector<2x1x8x32xf32>
    %26 = vector.shape_cast %25 : vector<2x1x8x32xf32> to vector<2x8x32xf32>
    %c0_26 = arith.constant 0 : index
    %c1_27 = arith.constant 1 : index
    %c0_28 = arith.constant 0 : index
    %c0_29 = arith.constant 0 : index
    %27 = vector.load %arg4[%c0_26, %c1_27, %c0_28, %c0_29] : memref<2x4x8x32xf32, #tpu.memory_space<vmem>>, vector<2x1x8x32xf32>
    %28 = vector.shape_cast %27 : vector<2x1x8x32xf32> to vector<2x8x32xf32>
    %c0_30 = arith.constant 0 : index
    %c1_31 = arith.constant 1 : index
    %c0_32 = arith.constant 0 : index
    %c0_33 = arith.constant 0 : index
    %29 = vector.load %arg5[%c0_30, %c1_31, %c0_32, %c0_33] : memref<2x4x8x32xf32, #tpu.memory_space<vmem>>, vector<2x1x8x32xf32>
    %30 = vector.shape_cast %29 : vector<2x1x8x32xf32> to vector<2x8x32xf32>
    "tpu.trace_start"() <{level = 10 : i32, message = "bqd,bkd->bqk"}> : () -> ()
    %cst_34 = arith.constant dense<0.000000e+00> : vector<2x8x8xf32>
    %31 = tpu.matmul %26, %28, %cst_34 {dimension_numbers = #tpu.dot_dimension_numbers<[2], [2], [1], [1], [0, 0, 0, 1, 1, 1], [0], [0]>} : vector<2x8x32xf32>, vector<2x8x32xf32>, vector<2x8x8xf32> -> vector<2x8x8xf32>
    "tpu.trace_stop"() : () -> ()
    %cst_35 = arith.constant 0.176776692 : f32
    %32 = vector.broadcast %cst_35 : f32 to vector<2x8x8xf32>
    %33 = arith.mulf %31, %32 : vector<2x8x8xf32>
    %cst_36 = arith.constant dense<0xFF800000> : vector<8x8xf32>
    %34 = vector.multi_reduction <maximumf>, %33, %cst_36 [0] : vector<2x8x8xf32> to vector<8x8xf32>
    %35 = vector.shape_cast %34 : vector<8x8xf32> to vector<1x8x8xf32>
    %36 = vector.broadcast %35 : vector<1x8x8xf32> to vector<2x8x8xf32>
    %37 = arith.subf %33, %36 : vector<2x8x8xf32>
    %38 = math.exp %37 : vector<2x8x8xf32>
    %cst_37 = arith.constant dense<0.000000e+00> : vector<8x8xf32>
    %39 = vector.multi_reduction <add>, %38, %cst_37 [0] : vector<2x8x8xf32> to vector<8x8xf32>
    %40 = vector.shape_cast %39 : vector<8x8xf32> to vector<1x8x8xf32>
    %41 = vector.broadcast %40 : vector<1x8x8xf32> to vector<2x8x8xf32>
    %42 = arith.divf %38, %41 : vector<2x8x8xf32>
    %c0_38 = arith.constant 0 : index
    %c1_39 = arith.constant 1 : index
    %c0_40 = arith.constant 0 : index
    %c0_41 = arith.constant 0 : index
    %43 = vector.load %arg7[%c0_38, %c1_39, %c0_40, %c0_41] : memref<2x4x8x8xf32, #tpu.memory_space<vmem>>, vector<2x1x8x8xf32>
    %44 = vector.shape_cast %43 : vector<2x1x8x8xf32> to vector<2x8x8xf32>
    %45 = vector.shape_cast %42 : vector<2x8x8xf32> to vector<2x1x8x8xf32>
    tpu.vector_store %arg7[%c0_38, %c1_39, %c0_40, %c0_41], %45 {strides = array<i32>} : memref<2x4x8x8xf32, #tpu.memory_space<vmem>>, vector<2x1x8x8xf32>,
    "tpu.trace_start"() <{level = 10 : i32, message = "bqk,bkd->bqd"}> : () -> ()
    %cst_42 = arith.constant dense<0.000000e+00> : vector<2x8x32xf32>
    %46 = tpu.matmul %42, %30, %cst_42 {dimension_numbers = #tpu.dot_dimension_numbers<[2], [1], [1], [2], [0, 0, 0, 1, 1, 2], [0], [0]>} : vector<2x8x8xf32>, vector<2x8x32xf32>, vector<2x8x32xf32> -> vector<2x8x32xf32>
    "tpu.trace_stop"() : () -> ()
    %c0_43 = arith.constant 0 : index
    %c1_44 = arith.constant 1 : index
    %c0_45 = arith.constant 0 : index
    %c0_46 = arith.constant 0 : index
    %47 = vector.load %arg6[%c0_43, %c1_44, %c0_45, %c0_46] : memref<2x4x8x32xf32, #tpu.memory_space<vmem>>, vector<2x1x8x32xf32>
    %48 = vector.shape_cast %47 : vector<2x1x8x32xf32> to vector<2x8x32xf32>
    %49 = vector.shape_cast %46 : vector<2x8x32xf32> to vector<2x1x8x32xf32>
    tpu.vector_store %arg6[%c0_43, %c1_44, %c0_45, %c0_46], %49 {strides = array<i32>} : memref<2x4x8x32xf32, #tpu.memory_space<vmem>>, vector<2x1x8x32xf32>,
    %c0_47 = arith.constant 0 : index
    %c2 = arith.constant 2 : index
    %c0_48 = arith.constant 0 : index
    %c0_49 = arith.constant 0 : index
    %50 = vector.load %arg3[%c0_47, %c2, %c0_48, %c0_49] : memref<2x4x8x32xf32, #tpu.memory_space<vmem>>, vector<2x1x8x32xf32>
    %51 = vector.shape_cast %50 : vector<2x1x8x32xf32> to vector<2x8x32xf32>
    %c0_50 = arith.constant 0 : index
    %c2_51 = arith.constant 2 : index
    %c0_52 = arith.constant 0 : index
    %c0_53 = arith.constant 0 : index
    %52 = vector.load %arg4[%c0_50, %c2_51, %c0_52, %c0_53] : memref<2x4x8x32xf32, #tpu.memory_space<vmem>>, vector<2x1x8x32xf32>
    %53 = vector.shape_cast %52 : vector<2x1x8x32xf32> to vector<2x8x32xf32>
    %c0_54 = arith.constant 0 : index
    %c2_55 = arith.constant 2 : index
    %c0_56 = arith.constant 0 : index
    %c0_57 = arith.constant 0 : index
    %54 = vector.load %arg5[%c0_54, %c2_55, %c0_56, %c0_57] : memref<2x4x8x32xf32, #tpu.memory_space<vmem>>, vector<2x1x8x32xf32>
    %55 = vector.shape_cast %54 : vector<2x1x8x32xf32> to vector<2x8x32xf32>
    "tpu.trace_start"() <{level = 10 : i32, message = "bqd,bkd->bqk"}> : () -> ()
    %cst_58 = arith.constant dense<0.000000e+00> : vector<2x8x8xf32>
    %56 = tpu.matmul %51, %53, %cst_58 {dimension_numbers = #tpu.dot_dimension_numbers<[2], [2], [1], [1], [0, 0, 0, 1, 1, 1], [0], [0]>} : vector<2x8x32xf32>, vector<2x8x32xf32>, vector<2x8x8xf32> -> vector<2x8x8xf32>
    "tpu.trace_stop"() : () -> ()
    %cst_59 = arith.constant 0.176776692 : f32
    %57 = vector.broadcast %cst_59 : f32 to vector<2x8x8xf32>
    %58 = arith.mulf %56, %57 : vector<2x8x8xf32>
    %cst_60 = arith.constant dense<0xFF800000> : vector<8x8xf32>
    %59 = vector.multi_reduction <maximumf>, %58, %cst_60 [0] : vector<2x8x8xf32> to vector<8x8xf32>
    %60 = vector.shape_cast %59 : vector<8x8xf32> to vector<1x8x8xf32>
    %61 = vector.broadcast %60 : vector<1x8x8xf32> to vector<2x8x8xf32>
    %62 = arith.subf %58, %61 : vector<2x8x8xf32>
    %63 = math.exp %62 : vector<2x8x8xf32>
    %cst_61 = arith.constant dense<0.000000e+00> : vector<8x8xf32>
    %64 = vector.multi_reduction <add>, %63, %cst_61 [0] : vector<2x8x8xf32> to vector<8x8xf32>
    %65 = vector.shape_cast %64 : vector<8x8xf32> to vector<1x8x8xf32>
    %66 = vector.broadcast %65 : vector<1x8x8xf32> to vector<2x8x8xf32>
    %67 = arith.divf %63, %66 : vector<2x8x8xf32>
    %c0_62 = arith.constant 0 : index
    %c2_63 = arith.constant 2 : index
    %c0_64 = arith.constant 0 : index
    %c0_65 = arith.constant 0 : index
    %68 = vector.load %arg7[%c0_62, %c2_63, %c0_64, %c0_65] : memref<2x4x8x8xf32, #tpu.memory_space<vmem>>, vector<2x1x8x8xf32>
    %69 = vector.shape_cast %68 : vector<2x1x8x8xf32> to vector<2x8x8xf32>
    %70 = vector.shape_cast %67 : vector<2x8x8xf32> to vector<2x1x8x8xf32>
    tpu.vector_store %arg7[%c0_62, %c2_63, %c0_64, %c0_65], %70 {strides = array<i32>} : memref<2x4x8x8xf32, #tpu.memory_space<vmem>>, vector<2x1x8x8xf32>,
    "tpu.trace_start"() <{level = 10 : i32, message = "bqk,bkd->bqd"}> : () -> ()
    %cst_66 = arith.constant dense<0.000000e+00> : vector<2x8x32xf32>
    %71 = tpu.matmul %67, %55, %cst_66 {dimension_numbers = #tpu.dot_dimension_numbers<[2], [1], [1], [2], [0, 0, 0, 1, 1, 2], [0], [0]>} : vector<2x8x8xf32>, vector<2x8x32xf32>, vector<2x8x32xf32> -> vector<2x8x32xf32>
    "tpu.trace_stop"() : () -> ()
    %c0_67 = arith.constant 0 : index
    %c2_68 = arith.constant 2 : index
    %c0_69 = arith.constant 0 : index
    %c0_70 = arith.constant 0 : index
    %72 = vector.load %arg6[%c0_67, %c2_68, %c0_69, %c0_70] : memref<2x4x8x32xf32, #tpu.memory_space<vmem>>, vector<2x1x8x32xf32>
    %73 = vector.shape_cast %72 : vector<2x1x8x32xf32> to vector<2x8x32xf32>
    %74 = vector.shape_cast %71 : vector<2x8x32xf32> to vector<2x1x8x32xf32>
    tpu.vector_store %arg6[%c0_67, %c2_68, %c0_69, %c0_70], %74 {strides = array<i32>} : memref<2x4x8x32xf32, #tpu.memory_space<vmem>>, vector<2x1x8x32xf32>,
    %c0_71 = arith.constant 0 : index
    %c3 = arith.constant 3 : index
    %c0_72 = arith.constant 0 : index
    %c0_73 = arith.constant 0 : index
    %75 = vector.load %arg3[%c0_71, %c3, %c0_72, %c0_73] : memref<2x4x8x32xf32, #tpu.memory_space<vmem>>, vector<2x1x8x32xf32>
    %76 = vector.shape_cast %75 : vector<2x1x8x32xf32> to vector<2x8x32xf32>
    %c0_74 = arith.constant 0 : index
    %c3_75 = arith.constant 3 : index
    %c0_76 = arith.constant 0 : index
    %c0_77 = arith.constant 0 : index
    %77 = vector.load %arg4[%c0_74, %c3_75, %c0_76, %c0_77] : memref<2x4x8x32xf32, #tpu.memory_space<vmem>>, vector<2x1x8x32xf32>
    %78 = vector.shape_cast %77 : vector<2x1x8x32xf32> to vector<2x8x32xf32>
    %c0_78 = arith.constant 0 : index
    %c3_79 = arith.constant 3 : index
    %c0_80 = arith.constant 0 : index
    %c0_81 = arith.constant 0 : index
    %79 = vector.load %arg5[%c0_78, %c3_79, %c0_80, %c0_81] : memref<2x4x8x32xf32, #tpu.memory_space<vmem>>, vector<2x1x8x32xf32>
    %80 = vector.shape_cast %79 : vector<2x1x8x32xf32> to vector<2x8x32xf32>
    "tpu.trace_start"() <{level = 10 : i32, message = "bqd,bkd->bqk"}> : () -> ()
    %cst_82 = arith.constant dense<0.000000e+00> : vector<2x8x8xf32>
    %81 = tpu.matmul %76, %78, %cst_82 {dimension_numbers = #tpu.dot_dimension_numbers<[2], [2], [1], [1], [0, 0, 0, 1, 1, 1], [0], [0]>} : vector<2x8x32xf32>, vector<2x8x32xf32>, vector<2x8x8xf32> -> vector<2x8x8xf32>
    "tpu.trace_stop"() : () -> ()
    %cst_83 = arith.constant 0.176776692 : f32
    %82 = vector.broadcast %cst_83 : f32 to vector<2x8x8xf32>
    %83 = arith.mulf %81, %82 : vector<2x8x8xf32>
    %cst_84 = arith.constant dense<0xFF800000> : vector<8x8xf32>
    %84 = vector.multi_reduction <maximumf>, %83, %cst_84 [0] : vector<2x8x8xf32> to vector<8x8xf32>
    %85 = vector.shape_cast %84 : vector<8x8xf32> to vector<1x8x8xf32>
    %86 = vector.broadcast %85 : vector<1x8x8xf32> to vector<2x8x8xf32>
    %87 = arith.subf %83, %86 : vector<2x8x8xf32>
    %88 = math.exp %87 : vector<2x8x8xf32>
    %cst_85 = arith.constant dense<0.000000e+00> : vector<8x8xf32>
    %89 = vector.multi_reduction <add>, %88, %cst_85 [0] : vector<2x8x8xf32> to vector<8x8xf32>
    %90 = vector.shape_cast %89 : vector<8x8xf32> to vector<1x8x8xf32>
    %91 = vector.broadcast %90 : vector<1x8x8xf32> to vector<2x8x8xf32>
    %92 = arith.divf %88, %91 : vector<2x8x8xf32>
    %c0_86 = arith.constant 0 : index
    %c3_87 = arith.constant 3 : index
    %c0_88 = arith.constant 0 : index
    %c0_89 = arith.constant 0 : index
    %93 = vector.load %arg7[%c0_86, %c3_87, %c0_88, %c0_89] : memref<2x4x8x8xf32, #tpu.memory_space<vmem>>, vector<2x1x8x8xf32>
    %94 = vector.shape_cast %93 : vector<2x1x8x8xf32> to vector<2x8x8xf32>
    %95 = vector.shape_cast %92 : vector<2x8x8xf32> to vector<2x1x8x8xf32>
    tpu.vector_store %arg7[%c0_86, %c3_87, %c0_88, %c0_89], %95 {strides = array<i32>} : memref<2x4x8x8xf32, #tpu.memory_space<vmem>>, vector<2x1x8x8xf32>,
    "tpu.trace_start"() <{level = 10 : i32, message = "bqk,bkd->bqd"}> : () -> ()
    %cst_90 = arith.constant dense<0.000000e+00> : vector<2x8x32xf32>
    %96 = tpu.matmul %92, %80, %cst_90 {dimension_numbers = #tpu.dot_dimension_numbers<[2], [1], [1], [2], [0, 0, 0, 1, 1, 2], [0], [0]>} : vector<2x8x8xf32>, vector<2x8x32xf32>, vector<2x8x32xf32> -> vector<2x8x32xf32>
    "tpu.trace_stop"() : () -> ()
    %c0_91 = arith.constant 0 : index
    %c3_92 = arith.constant 3 : index
    %c0_93 = arith.constant 0 : index
    %c0_94 = arith.constant 0 : index
    %97 = vector.load %arg6[%c0_91, %c3_92, %c0_93, %c0_94] : memref<2x4x8x32xf32, #tpu.memory_space<vmem>>, vector<2x1x8x32xf32>
    %98 = vector.shape_cast %97 : vector<2x1x8x32xf32> to vector<2x8x32xf32>
    %99 = vector.shape_cast %96 : vector<2x8x32xf32> to vector<2x1x8x32xf32>
    tpu.vector_store %arg6[%c0_91, %c3_92, %c0_93, %c0_94], %99 {strides = array<i32>} : memref<2x4x8x32xf32, #tpu.memory_space<vmem>>, vector<2x1x8x32xf32>,
    return
  }
  func.func @transform_0(%arg0: i32, %arg1: i32, %arg2: i32) -> (i32, i32, i32, i32) {
    %c0_i32 = arith.constant 0 : i32
    %c0_i32_0 = arith.constant 0 : i32
    %c0_i32_1 = arith.constant 0 : i32
    return %c0_i32, %arg0, %arg1, %c0_i32_0 : i32, i32, i32, i32
  }
  func.func @transform_1(%arg0: i32, %arg1: i32, %arg2: i32) -> (i32, i32, i32, i32) {
    %c0_i32 = arith.constant 0 : i32
    %c0_i32_0 = arith.constant 0 : i32
    %c0_i32_1 = arith.constant 0 : i32
    return %c0_i32, %arg0, %arg2, %c0_i32_0 : i32, i32, i32, i32
  }
  func.func @transform_2(%arg0: i32, %arg1: i32, %arg2: i32) -> (i32, i32, i32, i32) {
    %c0_i32 = arith.constant 0 : i32
    %c0_i32_0 = arith.constant 0 : i32
    %c0_i32_1 = arith.constant 0 : i32
    return %c0_i32, %arg0, %arg2, %c0_i32_0 : i32, i32, i32, i32
  }
  func.func @transform_3(%arg0: i32, %arg1: i32, %arg2: i32) -> (i32, i32, i32, i32) {
    %c0_i32 = arith.constant 0 : i32
    %c0_i32_0 = arith.constant 0 : i32
    %c0_i32_1 = arith.constant 0 : i32
    return %c0_i32, %arg0, %arg1, %c0_i32_0 : i32, i32, i32, i32
  }
  func.func @transform_4(%arg0: i32, %arg1: i32, %arg2: i32) -> (i32, i32, i32, i32) {
    %c0_i32 = arith.constant 0 : i32
    %c0_i32_0 = arith.constant 0 : i32
    return %c0_i32, %arg0, %arg1, %arg2 : i32, i32, i32, i32
  }
}

</mosaic_0001>

<llo_original>
// kernel: tpu_custom_call.1
$region0: #{tpu_custom_call.1}
  #allocation0 [shape = 'u32[]', space=smem, size = 0x4, offset = 0x4, fixed_abs, tag = 'smem constant byte address 0x4 - core index']
  #allocation1 [shape = 'u32[72,128]{1,0:T(1,128)}', space=vmem, size = 0x9000, scoped, tag = 'internal scratch']
  %s0 = inlined_call_operand.hbm [shape: f32[2,4,8,32], index: 0, kind: input, shape index: {}]
  %s1 = inlined_call_operand.hbm [shape: f32[2,4,8,32], index: 1, kind: input, shape index: {}]
  %s2 = inlined_call_operand.hbm [shape: f32[2,4,8,32], index: 2, kind: input, shape index: {}]
  %s3 = inlined_call_operand.hbm [shape: f32[2,4,8,32], index: 3, kind: output, shape index: {0}]
  %s4 = inlined_call_operand.hbm [shape: f32[2,4,8,8], index: 4, kind: output, shape index: {1}]
  %5 = xla_tuple %s3, %s4
  %s6 = sld [smem:[#allocation0]]
  $region42: #{tpu_custom_call.1} parent=0
    _
  %s8 = ssub.s32 1, %s6
  %s9 = scalar_select 0, %s8, %s6
  $region1: #{tpu_custom_call.1} parent=0
    #allocation2 [shape = 'u8[32768]{0}', space=vmem, size = 0x8000, scoped, tag = 'input window, operand 0, single buffered']
    #allocation3 [shape = 's32[1]{0}', space=sflag, size = 0x4, scoped, tag = 'scoped memory for tpu_custom_call.1']
    #allocation4 [shape = 's32[1]{0}', space=sflag, size = 0x4, scoped, tag = 'scoped memory for tpu_custom_call.1']
    #allocation5 [shape = 'u8[32768]{0}', space=vmem, size = 0x8000, scoped, tag = 'input window, operand 1, single buffered']
    #allocation6 [shape = 's32[1]{0}', space=sflag, size = 0x4, scoped, tag = 'scoped memory for tpu_custom_call.1']
    #allocation7 [shape = 'u8[32768]{0}', space=vmem, size = 0x8000, scoped, tag = 'input window, operand 2, single buffered']
    #allocation8 [shape = 'u8[32768]{0}', space=vmem, size = 0x8000, scoped, tag = 'output window, operand 0, single buffered']
    #allocation9 [shape = 'u8[32768]{0}', space=vmem, size = 0x8000, scoped, tag = 'output window, operand 1, single buffered']
    #allocation10 [shape = 's32[1]{0}', space=sflag, size = 0x4, scoped, tag = 'scoped memory for tpu_custom_call.1']
    %10 = vsyncpa [#allocation3], 0
    %11 = vsyncpa [#allocation6], 0
    %12 = vsyncpa [#allocation4], 0
    %13 = vsyncpa [#allocation10], 0
    // Predicated region
    $region2: #{tpu_custom_call.1} parent=1 // pred_check
      _
    $region3: #{tpu_custom_call.1} parent=1 // pred_check_branch
      %15 = sbr.rel (0) target = $region5
    $region4: #{tpu_custom_call.1} parent=1 // pred_region
      %17 = vsyncadd [#allocation3], 0
      %s18 = sshll.u32 %s0, 4
      %s19 = int_to_ptr.hbm [resolvable:$true] %s18
      %s20 = sshll.u32 [#allocation2], 4
      %s21 = int_to_ptr.vmem [resolvable:$true] %s20
      %26 = dma.hbm_to_vmem [thread:$0]  %s19, 1024, %s21, [#allocation3], 128, 128, 8
    $region5: #{tpu_custom_call.1} parent=1 // pred_fallthru
      _
    // Predicated region
    $region6: #{tpu_custom_call.1} parent=1 // pred_check
      _
    $region7: #{tpu_custom_call.1} parent=1 // pred_check_branch
      %28 = sbr.rel (0) target = $region9
    $region8: #{tpu_custom_call.1} parent=1 // pred_region
      %30 = vsyncadd [#allocation6], 0
      %s31 = sshll.u32 %s1, 4
      %s32 = int_to_ptr.hbm [resolvable:$true] %s31
      %s33 = sshll.u32 [#allocation5], 4
      %s34 = int_to_ptr.vmem [resolvable:$true] %s33
      %39 = dma.hbm_to_vmem [thread:$0]  %s32, 1024, %s34, [#allocation6], 128, 128, 8
    $region9: #{tpu_custom_call.1} parent=1 // pred_fallthru
      _
    // Predicated region
    $region10: #{tpu_custom_call.1} parent=1 // pred_check
      _
    $region11: #{tpu_custom_call.1} parent=1 // pred_check_branch
      %41 = sbr.rel (0) target = $region13
    $region12: #{tpu_custom_call.1} parent=1 // pred_region
      %43 = vsyncadd [#allocation6], 0
      %s44 = sshll.u32 %s2, 4
      %s45 = int_to_ptr.hbm [resolvable:$true] %s44
      %s46 = sshll.u32 [#allocation7], 4
      %s47 = int_to_ptr.vmem [resolvable:$true] %s46
      %52 = dma.hbm_to_vmem [thread:$0]  %s45, 1024, %s47, [#allocation6], 128, 128, 8
    $region13: #{tpu_custom_call.1} parent=1 // pred_fallthru
      _
    // Predicated region
    $region14: #{tpu_custom_call.1} parent=1 // pred_check
      _
    $region15: #{tpu_custom_call.1} parent=1 // pred_check_branch
      %54 = sbr.rel (0) target = $region17
    $region16: #{tpu_custom_call.1} parent=1 // pred_region
      %56 = dma.done [#allocation3], 1024
    $region17: #{tpu_custom_call.1} parent=1 // pred_fallthru
      _
    // Predicated region
    $region18: #{tpu_custom_call.1} parent=1 // pred_check
      _
    $region19: #{tpu_custom_call.1} parent=1 // pred_check_branch
      %58 = sbr.rel (0) target = $region21
    $region20: #{tpu_custom_call.1} parent=1 // pred_region
      %60 = dma.done [#allocation6], 1024
    $region21: #{tpu_custom_call.1} parent=1 // pred_fallthru
      _
    // Predicated region
    $region22: #{tpu_custom_call.1} parent=1 // pred_check
      _
    $region23: #{tpu_custom_call.1} parent=1 // pred_check_branch
      %62 = sbr.rel (0) target = $region25
    $region24: #{tpu_custom_call.1} parent=1 // pred_region
      %64 = dma.done [#allocation6], 1024
    $region25: #{tpu_custom_call.1} parent=1 // pred_fallthru
      _
    %v65 = vld [vmem:[#allocation2] sm:$0xff]
    %v66 = vld [vmem:[#allocation2 + $0x20] sm:$0xff]
    %v67 = vld [vmem:[#allocation5] sm:$0xff]
    %v68 = vld [vmem:[#allocation5 + $0x20] sm:$0xff]
    %v69 = vld [vmem:[#allocation7] sm:$0xff]
    %v70 = vld [vmem:[#allocation7 + $0x20] sm:$0xff]
    %vm71 = vcmask 261120
    %v73 = vsel %vm71, %v65, 0
    %v76 = vsel %vm71, %v67, 0
    %78 = vmatpush.xpose.msra.mxu0 0.0
    %79 = vmatpush.xpose.msra.mxu0 0.0
    %80 = vmatpush.xpose.msra.mxu0 0.0
    %81 = vmatpush.xpose.msra.mxu0 0.0
    %82 = vmatpush.xpose.msra.mxu0 0.0
    %83 = vmatpush.xpose.msra.mxu0 0.0
    %84 = vmatpush.xpose.msra.mxu0 0.0
    %85 = vmatpush.xpose.msra.mxu0 0.0
    %86 = vmatpush.xpose.msra.mxu0 0.0
    %87 = vmatpush.xpose.msra.mxu0 0.0
    %88 = vmatpush.xpose.msra.mxu0 0.0
    %89 = vmatpush.xpose.msra.mxu0 0.0
    %90 = vmatpush.xpose.msra.mxu0 0.0
    %91 = vmatpush.xpose.msra.mxu0 0.0
    %92 = vmatpush.xpose.msra.mxu0 0.0
    %93 = vmatpush.xpose.msra.mxu0 %v76
    %94 = vmatmul.f32.gmra.mxu0 %v73
    %v95 = vpop.f32.mrf.mxu0
    %v96 = vadd.f32 0.0, %v95
    %97 = vdwg.mxu0
    %v99 = vsel %vm71, %v66, 0
    %v102 = vsel %vm71, %v68, 0
    %104 = vmatpush.xpose.msra.mxu0 0.0
    %105 = vmatpush.xpose.msra.mxu0 0.0
    %106 = vmatpush.xpose.msra.mxu0 0.0
    %107 = vmatpush.xpose.msra.mxu0 0.0
    %108 = vmatpush.xpose.msra.mxu0 0.0
    %109 = vmatpush.xpose.msra.mxu0 0.0
    %110 = vmatpush.xpose.msra.mxu0 0.0
    %111 = vmatpush.xpose.msra.mxu0 0.0
    %112 = vmatpush.xpose.msra.mxu0 0.0
    %113 = vmatpush.xpose.msra.mxu0 0.0
    %114 = vmatpush.xpose.msra.mxu0 0.0
    %115 = vmatpush.xpose.msra.mxu0 0.0
    %116 = vmatpush.xpose.msra.mxu0 0.0
    %117 = vmatpush.xpose.msra.mxu0 0.0
    %118 = vmatpush.xpose.msra.mxu0 0.0
    %119 = vmatpush.xpose.msra.mxu0 %v102
    %120 = vmatmul.f32.gmra.mxu0 %v99
    %v121 = vpop.f32.mrf.mxu0
    %v122 = vadd.f32 0.0, %v121
    %123 = vdwg.mxu0
    %v124 = vmul.f32 %v96, 0.17677669
    %v125 = vmul.f32 %v122, 0.17677669
    %vm126 = vcmask 64512
    %v127 = vsel %vm126, %v124, -inf
    %v128 = vsel %vm126, %v125, -inf
    %v129 = vmax.f32 %v127, %v128
    %v130 = vsub.f32 %v124, %v129
    %v131 = vsub.f32 %v125, %v129
    %v132 = vmul.f32 %v130, 1.442695
    %v133 = vpow.pop %v132
    %v134 = vmul.f32 %v131, 1.442695
    %v135 = vpow.pop %v134
    %v136 = vsel %vm126, %v133, 0.0
    %v137 = vsel %vm126, %v135, 0.0
    %v138 = vadd.f32 %v136, %v137
    %v139 = vrcp.pop %v138
    %v140 = vmul.f32 %v138, %v139
    %v141 = vsub.f32 1.0, %v140
    %v142 = vmul.f32 %v139, %v141
    %v143 = vadd.f32 %v139, %v142
    %vm144 = vweird.f32 %v138
    %vm145 = vweird.f32 %v139
    %vm146 = vmor %vm144, %vm145
    %v147 = vsel %vm146, %v139, %v143
    %v148 = vand.u32 2147483647, %v138
    %vm149 = vcmp.eq.f32.partialorder %v148, 8.507059e+37
    %v150 = vand.u32 %v138, 2147483648
    %v151 = vor.u32 1.1754944e-38, %v150
    %v152 = vsel %vm149, %v151, %v147
    %v153 = vmul.f32 %v133, %v152
    %v154 = vmul.f32 %v135, %v152
    %155 = vst.msk [vmem:[#allocation9] sm:$0xff] %vm126, %v153
    %156 = vst.msk [vmem:[#allocation9 + $0x20] sm:$0xff] %vm126, %v154
    %v158 = vsel %vm126, %v153, 0
    %160 = vmatpush.msra.mxu0 0.0
    %161 = vmatpush.msra.mxu0 0.0
    %162 = vmatpush.msra.mxu0 0.0
    %163 = vmatpush.msra.mxu0 0.0
    %164 = vmatpush.msra.mxu0 0.0
    %165 = vmatpush.msra.mxu0 0.0
    %166 = vmatpush.msra.mxu0 0.0
    %167 = vmatpush.msra.mxu0 0.0
    %168 = vmatpush.msra.mxu0 0.0
    %169 = vmatpush.msra.mxu0 0.0
    %170 = vmatpush.msra.mxu0 0.0
    %171 = vmatpush.msra.mxu0 0.0
    %172 = vmatpush.msra.mxu0 0.0
    %173 = vmatpush.msra.mxu0 0.0
    %174 = vmatpush.msra.mxu0 0.0
    %175 = vmatpush.msra.mxu0 %v69
    %176 = vmatmul.f32.gmra.mxu0 %v158
    %v177 = vpop.f32.mrf.mxu0
    %v178 = vadd.f32 0.0, %v177
    %179 = vdwg.mxu0
    %v181 = vsel %vm126, %v154, 0
    %183 = vmatpush.msra.mxu0 0.0
    %184 = vmatpush.msra.mxu0 0.0
    %185 = vmatpush.msra.mxu0 0.0
    %186 = vmatpush.msra.mxu0 0.0
    %187 = vmatpush.msra.mxu0 0.0
    %188 = vmatpush.msra.mxu0 0.0
    %189 = vmatpush.msra.mxu0 0.0
    %190 = vmatpush.msra.mxu0 0.0
    %191 = vmatpush.msra.mxu0 0.0
    %192 = vmatpush.msra.mxu0 0.0
    %193 = vmatpush.msra.mxu0 0.0
    %194 = vmatpush.msra.mxu0 0.0
    %195 = vmatpush.msra.mxu0 0.0
    %196 = vmatpush.msra.mxu0 0.0
    %197 = vmatpush.msra.mxu0 0.0
    %198 = vmatpush.msra.mxu0 %v70
    %199 = vmatmul.f32.gmra.mxu0 %v181
    %v200 = vpop.f32.mrf.mxu0
    %v201 = vadd.f32 0.0, %v200
    %202 = vdwg.mxu0
    %203 = vst.msk [vmem:[#allocation8] sm:$0xff] %vm71, %v178
    %204 = vst.msk [vmem:[#allocation8 + $0x20] sm:$0xff] %vm71, %v201
    %s205 = scalar_lea.vmem [#allocation2], 8
    %v206 = vld [vmem:[%s205] sm:$0xff]
    %v207 = vld [vmem:[%s205 + $0x20] sm:$0xff]
    %s208 = scalar_lea.vmem [#allocation5], 8
    %v209 = vld [vmem:[%s208] sm:$0xff]
    %v210 = vld [vmem:[%s208 + $0x20] sm:$0xff]
    %s211 = scalar_lea.vmem [#allocation7], 8
    %v212 = vld [vmem:[%s211] sm:$0xff]
    %v213 = vld [vmem:[%s211 + $0x20] sm:$0xff]
    %v215 = vsel %vm71, %v206, 0
    %v218 = vsel %vm71, %v209, 0
    %220 = vmatpush.xpose.msra.mxu0 0.0
    %221 = vmatpush.xpose.msra.mxu0 0.0
    %222 = vmatpush.xpose.msra.mxu0 0.0
    %223 = vmatpush.xpose.msra.mxu0 0.0
    %224 = vmatpush.xpose.msra.mxu0 0.0
    %225 = vmatpush.xpose.msra.mxu0 0.0
    %226 = vmatpush.xpose.msra.mxu0 0.0
    %227 = vmatpush.xpose.msra.mxu0 0.0
    %228 = vmatpush.xpose.msra.mxu0 0.0
    %229 = vmatpush.xpose.msra.mxu0 0.0
    %230 = vmatpush.xpose.msra.mxu0 0.0
    %231 = vmatpush.xpose.msra.mxu0 0.0
    %232 = vmatpush.xpose.msra.mxu0 0.0
    %233 = vmatpush.xpose.msra.mxu0 0.0
    %234 = vmatpush.xpose.msra.mxu0 0.0
    %235 = vmatpush.xpose.msra.mxu0 %v218
    %236 = vmatmul.f32.gmra.mxu0 %v215
    %v237 = vpop.f32.mrf.mxu0
    %v238 = vadd.f32 0.0, %v237
    %239 = vdwg.mxu0
    %v241 = vsel %vm71, %v207, 0
    %v244 = vsel %vm71, %v210, 0
    %246 = vmatpush.xpose.msra.mxu0 0.0
    %247 = vmatpush.xpose.msra.mxu0 0.0
    %248 = vmatpush.xpose.msra.mxu0 0.0
    %249 = vmatpush.xpose.msra.mxu0 0.0
    %250 = vmatpush.xpose.msra.mxu0 0.0
    %251 = vmatpush.xpose.msra.mxu0 0.0
    %252 = vmatpush.xpose.msra.mxu0 0.0
    %253 = vmatpush.xpose.msra.mxu0 0.0
    %254 = vmatpush.xpose.msra.mxu0 0.0
    %255 = vmatpush.xpose.msra.mxu0 0.0
    %256 = vmatpush.xpose.msra.mxu0 0.0
    %257 = vmatpush.xpose.msra.mxu0 0.0
    %258 = vmatpush.xpose.msra.mxu0 0.0
    %259 = vmatpush.xpose.msra.mxu0 0.0
    %260 = vmatpush.xpose.msra.mxu0 0.0
    %261 = vmatpush.xpose.msra.mxu0 %v244
    %262 = vmatmul.f32.gmra.mxu0 %v241
    %v263 = vpop.f32.mrf.mxu0
    %v264 = vadd.f32 0.0, %v263
    %265 = vdwg.mxu0
    %v266 = vmul.f32 %v238, 0.17677669
    %v267 = vmul.f32 %v264, 0.17677669
    %v268 = vsel %vm126, %v266, -inf
    %v269 = vsel %vm126, %v267, -inf
    %v270 = vmax.f32 %v268, %v269
    %v271 = vsub.f32 %v266, %v270
    %v272 = vsub.f32 %v267, %v270
    %v273 = vmul.f32 %v271, 1.442695
    %v274 = vpow.pop %v273
    %v275 = vmul.f32 %v272, 1.442695
    %v276 = vpow.pop %v275
    %v277 = vsel %vm126, %v274, 0.0
    %v278 = vsel %vm126, %v276, 0.0
    %v279 = vadd.f32 %v277, %v278
    %v280 = vrcp.pop %v279
    %v281 = vmul.f32 %v279, %v280
    %v282 = vsub.f32 1.0, %v281
    %v283 = vmul.f32 %v280, %v282
    %v284 = vadd.f32 %v280, %v283
    %vm285 = vweird.f32 %v279
    %vm286 = vweird.f32 %v280
    %vm287 = vmor %vm285, %vm286
    %v288 = vsel %vm287, %v280, %v284
    %v289 = vand.u32 2147483647, %v279
    %vm290 = vcmp.eq.f32.partialorder %v289, 8.507059e+37
    %v291 = vand.u32 %v279, 2147483648
    %v292 = vor.u32 1.1754944e-38, %v291
    %v293 = vsel %vm290, %v292, %v288
    %v294 = vmul.f32 %v274, %v293
    %v295 = vmul.f32 %v276, %v293
    %s296 = scalar_lea.vmem [#allocation9], 8
    %297 = vst.msk [vmem:[%s296] sm:$0xff] %vm126, %v294
    %298 = vst.msk [vmem:[%s296 + $0x20] sm:$0xff] %vm126, %v295
    %v300 = vsel %vm126, %v294, 0
    %302 = vmatpush.msra.mxu0 0.0
    %303 = vmatpush.msra.mxu0 0.0
    %304 = vmatpush.msra.mxu0 0.0
    %305 = vmatpush.msra.mxu0 0.0
    %306 = vmatpush.msra.mxu0 0.0
    %307 = vmatpush.msra.mxu0 0.0
    %308 = vmatpush.msra.mxu0 0.0
    %309 = vmatpush.msra.mxu0 0.0
    %310 = vmatpush.msra.mxu0 0.0
    %311 = vmatpush.msra.mxu0 0.0
    %312 = vmatpush.msra.mxu0 0.0
    %313 = vmatpush.msra.mxu0 0.0
    %314 = vmatpush.msra.mxu0 0.0
    %315 = vmatpush.msra.mxu0 0.0
    %316 = vmatpush.msra.mxu0 0.0
    %317 = vmatpush.msra.mxu0 %v212
    %318 = vmatmul.f32.gmra.mxu0 %v300
    %v319 = vpop.f32.mrf.mxu0
    %v320 = vadd.f32 0.0, %v319
    %321 = vdwg.mxu0
    %v323 = vsel %vm126, %v295, 0
    %325 = vmatpush.msra.mxu0 0.0
    %326 = vmatpush.msra.mxu0 0.0
    %327 = vmatpush.msra.mxu0 0.0
    %328 = vmatpush.msra.mxu0 0.0
    %329 = vmatpush.msra.mxu0 0.0
    %330 = vmatpush.msra.mxu0 0.0
    %331 = vmatpush.msra.mxu0 0.0
    %332 = vmatpush.msra.mxu0 0.0
    %333 = vmatpush.msra.mxu0 0.0
    %334 = vmatpush.msra.mxu0 0.0
    %335 = vmatpush.msra.mxu0 0.0
    %336 = vmatpush.msra.mxu0 0.0
    %337 = vmatpush.msra.mxu0 0.0
    %338 = vmatpush.msra.mxu0 0.0
    %339 = vmatpush.msra.mxu0 0.0
    %340 = vmatpush.msra.mxu0 %v213
    %341 = vmatmul.f32.gmra.mxu0 %v323
    %v342 = vpop.f32.mrf.mxu0
    %v343 = vadd.f32 0.0, %v342
    %344 = vdwg.mxu0
    %s345 = scalar_lea.vmem [#allocation8], 8
    %346 = vst.msk [vmem:[%s345] sm:$0xff] %vm71, %v320
    %347 = vst.msk [vmem:[%s345 + $0x20] sm:$0xff] %vm71, %v343
    %s348 = scalar_lea.vmem [#allocation2], 16
    %v349 = vld [vmem:[%s348] sm:$0xff]
    %v350 = vld [vmem:[%s348 + $0x20] sm:$0xff]
    %s351 = scalar_lea.vmem [#allocation5], 16
    %v352 = vld [vmem:[%s351] sm:$0xff]
    %v353 = vld [vmem:[%s351 + $0x20] sm:$0xff]
    %s354 = scalar_lea.vmem [#allocation7], 16
    %v355 = vld [vmem:[%s354] sm:$0xff]
    %v356 = vld [vmem:[%s354 + $0x20] sm:$0xff]
    %v358 = vsel %vm71, %v349, 0
    %v361 = vsel %vm71, %v352, 0
    %363 = vmatpush.xpose.msra.mxu0 0.0
    %364 = vmatpush.xpose.msra.mxu0 0.0
    %365 = vmatpush.xpose.msra.mxu0 0.0
    %366 = vmatpush.xpose.msra.mxu0 0.0
    %367 = vmatpush.xpose.msra.mxu0 0.0
    %368 = vmatpush.xpose.msra.mxu0 0.0
    %369 = vmatpush.xpose.msra.mxu0 0.0
    %370 = vmatpush.xpose.msra.mxu0 0.0
    %371 = vmatpush.xpose.msra.mxu0 0.0
    %372 = vmatpush.xpose.msra.mxu0 0.0
    %373 = vmatpush.xpose.msra.mxu0 0.0
    %374 = vmatpush.xpose.msra.mxu0 0.0
    %375 = vmatpush.xpose.msra.mxu0 0.0
    %376 = vmatpush.xpose.msra.mxu0 0.0
    %377 = vmatpush.xpose.msra.mxu0 0.0
    %378 = vmatpush.xpose.msra.mxu0 %v361
    %379 = vmatmul.f32.gmra.mxu0 %v358
    %v380 = vpop.f32.mrf.mxu0
    %v381 = vadd.f32 0.0, %v380
    %382 = vdwg.mxu0
    %v384 = vsel %vm71, %v350, 0
    %v387 = vsel %vm71, %v353, 0
    %389 = vmatpush.xpose.msra.mxu0 0.0
    %390 = vmatpush.xpose.msra.mxu0 0.0
    %391 = vmatpush.xpose.msra.mxu0 0.0
    %392 = vmatpush.xpose.msra.mxu0 0.0
    %393 = vmatpush.xpose.msra.mxu0 0.0
    %394 = vmatpush.xpose.msra.mxu0 0.0
    %395 = vmatpush.xpose.msra.mxu0 0.0
    %396 = vmatpush.xpose.msra.mxu0 0.0
    %397 = vmatpush.xpose.msra.mxu0 0.0
    %398 = vmatpush.xpose.msra.mxu0 0.0
    %399 = vmatpush.xpose.msra.mxu0 0.0
    %400 = vmatpush.xpose.msra.mxu0 0.0
    %401 = vmatpush.xpose.msra.mxu0 0.0
    %402 = vmatpush.xpose.msra.mxu0 0.0
    %403 = vmatpush.xpose.msra.mxu0 0.0
    %404 = vmatpush.xpose.msra.mxu0 %v387
    %405 = vmatmul.f32.gmra.mxu0 %v384
    %v406 = vpop.f32.mrf.mxu0
    %v407 = vadd.f32 0.0, %v406
    %408 = vdwg.mxu0
    %v409 = vmul.f32 %v381, 0.17677669
    %v410 = vmul.f32 %v407, 0.17677669
    %v411 = vsel %vm126, %v409, -inf
    %v412 = vsel %vm126, %v410, -inf
    %v413 = vmax.f32 %v411, %v412
    %v414 = vsub.f32 %v409, %v413
    %v415 = vsub.f32 %v410, %v413
    %v416 = vmul.f32 %v414, 1.442695
    %v417 = vpow.pop %v416
    %v418 = vmul.f32 %v415, 1.442695
    %v419 = vpow.pop %v418
    %v420 = vsel %vm126, %v417, 0.0
    %v421 = vsel %vm126, %v419, 0.0
    %v422 = vadd.f32 %v420, %v421
    %v423 = vrcp.pop %v422
    %v424 = vmul.f32 %v422, %v423
    %v425 = vsub.f32 1.0, %v424
    %v426 = vmul.f32 %v423, %v425
    %v427 = vadd.f32 %v423, %v426
    %vm428 = vweird.f32 %v422
    %vm429 = vweird.f32 %v423
    %vm430 = vmor %vm428, %vm429
    %v431 = vsel %vm430, %v423, %v427
    %v432 = vand.u32 2147483647, %v422
    %vm433 = vcmp.eq.f32.partialorder %v432, 8.507059e+37
    %v434 = vand.u32 %v422, 2147483648
    %v435 = vor.u32 1.1754944e-38, %v434
    %v436 = vsel %vm433, %v435, %v431
    %v437 = vmul.f32 %v417, %v436
    %v438 = vmul.f32 %v419, %v436
    %s439 = scalar_lea.vmem [#allocation9], 16
    %440 = vst.msk [vmem:[%s439] sm:$0xff] %vm126, %v437
    %441 = vst.msk [vmem:[%s439 + $0x20] sm:$0xff] %vm126, %v438
    %v443 = vsel %vm126, %v437, 0
    %445 = vmatpush.msra.mxu0 0.0
    %446 = vmatpush.msra.mxu0 0.0
    %447 = vmatpush.msra.mxu0 0.0
    %448 = vmatpush.msra.mxu0 0.0
    %449 = vmatpush.msra.mxu0 0.0
    %450 = vmatpush.msra.mxu0 0.0
    %451 = vmatpush.msra.mxu0 0.0
    %452 = vmatpush.msra.mxu0 0.0
    %453 = vmatpush.msra.mxu0 0.0
    %454 = vmatpush.msra.mxu0 0.0
    %455 = vmatpush.msra.mxu0 0.0
    %456 = vmatpush.msra.mxu0 0.0
    %457 = vmatpush.msra.mxu0 0.0
    %458 = vmatpush.msra.mxu0 0.0
    %459 = vmatpush.msra.mxu0 0.0
    %460 = vmatpush.msra.mxu0 %v355
    %461 = vmatmul.f32.gmra.mxu0 %v443
    %v462 = vpop.f32.mrf.mxu0
    %v463 = vadd.f32 0.0, %v462
    %464 = vdwg.mxu0
    %v466 = vsel %vm126, %v438, 0
    %468 = vmatpush.msra.mxu0 0.0
    %469 = vmatpush.msra.mxu0 0.0
    %470 = vmatpush.msra.mxu0 0.0
    %471 = vmatpush.msra.mxu0 0.0
    %472 = vmatpush.msra.mxu0 0.0
    %473 = vmatpush.msra.mxu0 0.0
    %474 = vmatpush.msra.mxu0 0.0
    %475 = vmatpush.msra.mxu0 0.0
    %476 = vmatpush.msra.mxu0 0.0
    %477 = vmatpush.msra.mxu0 0.0
    %478 = vmatpush.msra.mxu0 0.0
    %479 = vmatpush.msra.mxu0 0.0
    %480 = vmatpush.msra.mxu0 0.0
    %481 = vmatpush.msra.mxu0 0.0
    %482 = vmatpush.msra.mxu0 0.0
    %483 = vmatpush.msra.mxu0 %v356
    %484 = vmatmul.f32.gmra.mxu0 %v466
    %v485 = vpop.f32.mrf.mxu0
    %v486 = vadd.f32 0.0, %v485
    %487 = vdwg.mxu0
    %s488 = scalar_lea.vmem [#allocation8], 16
    %489 = vst.msk [vmem:[%s488] sm:$0xff] %vm71, %v463
    %490 = vst.msk [vmem:[%s488 + $0x20] sm:$0xff] %vm71, %v486
    %s491 = scalar_lea.vmem [#allocation2], 24
    %v492 = vld [vmem:[%s491] sm:$0xff]
    %v493 = vld [vmem:[%s491 + $0x20] sm:$0xff]
    %s494 = scalar_lea.vmem [#allocation5], 24
    %v495 = vld [vmem:[%s494] sm:$0xff]
    %v496 = vld [vmem:[%s494 + $0x20] sm:$0xff]
    %s497 = scalar_lea.vmem [#allocation7], 24
    %v498 = vld [vmem:[%s497] sm:$0xff]
    %v499 = vld [vmem:[%s497 + $0x20] sm:$0xff]
    %v501 = vsel %vm71, %v492, 0
    %v504 = vsel %vm71, %v495, 0
    %506 = vmatpush.xpose.msra.mxu0 0.0
    %507 = vmatpush.xpose.msra.mxu0 0.0
    %508 = vmatpush.xpose.msra.mxu0 0.0
    %509 = vmatpush.xpose.msra.mxu0 0.0
    %510 = vmatpush.xpose.msra.mxu0 0.0
    %511 = vmatpush.xpose.msra.mxu0 0.0
    %512 = vmatpush.xpose.msra.mxu0 0.0
    %513 = vmatpush.xpose.msra.mxu0 0.0
    %514 = vmatpush.xpose.msra.mxu0 0.0
    %515 = vmatpush.xpose.msra.mxu0 0.0
    %516 = vmatpush.xpose.msra.mxu0 0.0
    %517 = vmatpush.xpose.msra.mxu0 0.0
    %518 = vmatpush.xpose.msra.mxu0 0.0
    %519 = vmatpush.xpose.msra.mxu0 0.0
    %520 = vmatpush.xpose.msra.mxu0 0.0
    %521 = vmatpush.xpose.msra.mxu0 %v504
    %522 = vmatmul.f32.gmra.mxu0 %v501
    %v523 = vpop.f32.mrf.mxu0
    %v524 = vadd.f32 0.0, %v523
    %525 = vdwg.mxu0
    %v527 = vsel %vm71, %v493, 0
    %v530 = vsel %vm71, %v496, 0
    %532 = vmatpush.xpose.msra.mxu0 0.0
    %533 = vmatpush.xpose.msra.mxu0 0.0
    %534 = vmatpush.xpose.msra.mxu0 0.0
    %535 = vmatpush.xpose.msra.mxu0 0.0
    %536 = vmatpush.xpose.msra.mxu0 0.0
    %537 = vmatpush.xpose.msra.mxu0 0.0
    %538 = vmatpush.xpose.msra.mxu0 0.0
    %539 = vmatpush.xpose.msra.mxu0 0.0
    %540 = vmatpush.xpose.msra.mxu0 0.0
    %541 = vmatpush.xpose.msra.mxu0 0.0
    %542 = vmatpush.xpose.msra.mxu0 0.0
    %543 = vmatpush.xpose.msra.mxu0 0.0
    %544 = vmatpush.xpose.msra.mxu0 0.0
    %545 = vmatpush.xpose.msra.mxu0 0.0
    %546 = vmatpush.xpose.msra.mxu0 0.0
    %547 = vmatpush.xpose.msra.mxu0 %v530
    %548 = vmatmul.f32.gmra.mxu0 %v527
    %v549 = vpop.f32.mrf.mxu0
    %v550 = vadd.f32 0.0, %v549
    %551 = vdwg.mxu0
    %v552 = vmul.f32 %v524, 0.17677669
    %v553 = vmul.f32 %v550, 0.17677669
    %v554 = vsel %vm126, %v552, -inf
    %v555 = vsel %vm126, %v553, -inf
    %v556 = vmax.f32 %v554, %v555
    %v557 = vsub.f32 %v552, %v556
    %v558 = vsub.f32 %v553, %v556
    %v559 = vmul.f32 %v557, 1.442695
    %v560 = vpow.pop %v559
    %v561 = vmul.f32 %v558, 1.442695
    %v562 = vpow.pop %v561
    %v563 = vsel %vm126, %v560, 0.0
    %v564 = vsel %vm126, %v562, 0.0
    %v565 = vadd.f32 %v563, %v564
    %v566 = vrcp.pop %v565
    %v567 = vmul.f32 %v565, %v566
    %v568 = vsub.f32 1.0, %v567
    %v569 = vmul.f32 %v566, %v568
    %v570 = vadd.f32 %v566, %v569
    %vm571 = vweird.f32 %v565
    %vm572 = vweird.f32 %v566
    %vm573 = vmor %vm571, %vm572
    %v574 = vsel %vm573, %v566, %v570
    %v575 = vand.u32 2147483647, %v565
    %vm576 = vcmp.eq.f32.partialorder %v575, 8.507059e+37
    %v577 = vand.u32 %v565, 2147483648
    %v578 = vor.u32 1.1754944e-38, %v577
    %v579 = vsel %vm576, %v578, %v574
    %v580 = vmul.f32 %v560, %v579
    %v581 = vmul.f32 %v562, %v579
    %s582 = scalar_lea.vmem [#allocation9], 24
    %583 = vst.msk [vmem:[%s582] sm:$0xff] %vm126, %v580
    %584 = vst.msk [vmem:[%s582 + $0x20] sm:$0xff] %vm126, %v581
    %v586 = vsel %vm126, %v580, 0
    %588 = vmatpush.msra.mxu0 0.0
    %589 = vmatpush.msra.mxu0 0.0
    %590 = vmatpush.msra.mxu0 0.0
    %591 = vmatpush.msra.mxu0 0.0
    %592 = vmatpush.msra.mxu0 0.0
    %593 = vmatpush.msra.mxu0 0.0
    %594 = vmatpush.msra.mxu0 0.0
    %595 = vmatpush.msra.mxu0 0.0
    %596 = vmatpush.msra.mxu0 0.0
    %597 = vmatpush.msra.mxu0 0.0
    %598 = vmatpush.msra.mxu0 0.0
    %599 = vmatpush.msra.mxu0 0.0
    %600 = vmatpush.msra.mxu0 0.0
    %601 = vmatpush.msra.mxu0 0.0
    %602 = vmatpush.msra.mxu0 0.0
    %603 = vmatpush.msra.mxu0 %v498
    %604 = vmatmul.f32.gmra.mxu0 %v586
    %v605 = vpop.f32.mrf.mxu0
    %v606 = vadd.f32 0.0, %v605
    %607 = vdwg.mxu0
    %v609 = vsel %vm126, %v581, 0
    %611 = vmatpush.msra.mxu0 0.0
    %612 = vmatpush.msra.mxu0 0.0
    %613 = vmatpush.msra.mxu0 0.0
    %614 = vmatpush.msra.mxu0 0.0
    %615 = vmatpush.msra.mxu0 0.0
    %616 = vmatpush.msra.mxu0 0.0
    %617 = vmatpush.msra.mxu0 0.0
    %618 = vmatpush.msra.mxu0 0.0
    %619 = vmatpush.msra.mxu0 0.0
    %620 = vmatpush.msra.mxu0 0.0
    %621 = vmatpush.msra.mxu0 0.0
    %622 = vmatpush.msra.mxu0 0.0
    %623 = vmatpush.msra.mxu0 0.0
    %624 = vmatpush.msra.mxu0 0.0
    %625 = vmatpush.msra.mxu0 0.0
    %626 = vmatpush.msra.mxu0 %v499
    %627 = vmatmul.f32.gmra.mxu0 %v609
    %v628 = vpop.f32.mrf.mxu0
    %v629 = vadd.f32 0.0, %v628
    %630 = vdwg.mxu0
    %s631 = scalar_lea.vmem [#allocation8], 24
    %632 = vst.msk [vmem:[%s631] sm:$0xff] %vm71, %v606
    %633 = vst.msk [vmem:[%s631 + $0x20] sm:$0xff] %vm71, %v629
    // Predicated region
    $region26: #{tpu_custom_call.1} parent=1 // pred_check
      _
    $region27: #{tpu_custom_call.1} parent=1 // pred_check_branch
      %635 = sbr.rel (0) target = $region29
    $region28: #{tpu_custom_call.1} parent=1 // pred_region
      %637 = vsyncadd [#allocation4], 0
      %s638 = sshll.u32 [#allocation8], 4
      %s639 = int_to_ptr.vmem [resolvable:$true] %s638
      %s640 = sshll.u32 %s3, 4
      %s641 = int_to_ptr.hbm [resolvable:$true] %s640
      %646 = dma.vmem_to_hbm [thread:$0]  %s639, 1024, %s641, [#allocation4], 128, 128, 8
    $region29: #{tpu_custom_call.1} parent=1 // pred_fallthru
      _
    // Predicated region
    $region30: #{tpu_custom_call.1} parent=1 // pred_check
      _
    $region31: #{tpu_custom_call.1} parent=1 // pred_check_branch
      %648 = sbr.rel (0) target = $region33
    $region32: #{tpu_custom_call.1} parent=1 // pred_region
      %650 = vsyncadd [#allocation10], 0
      %s651 = sshll.u32 [#allocation9], 4
      %s652 = int_to_ptr.vmem [resolvable:$true] %s651
      %s653 = sshll.u32 %s4, 4
      %s654 = int_to_ptr.hbm [resolvable:$true] %s653
      %659 = dma.vmem_to_hbm [thread:$0]  %s652, 1024, %s654, [#allocation10], 128, 128, 8
    $region33: #{tpu_custom_call.1} parent=1 // pred_fallthru
      _
    // Predicated region
    $region34: #{tpu_custom_call.1} parent=1 // pred_check
      _
    $region35: #{tpu_custom_call.1} parent=1 // pred_check_branch
      %661 = sbr.rel (0) target = $region37
    $region36: #{tpu_custom_call.1} parent=1 // pred_region
      %663 = dma.done [#allocation4], 1024
    $region37: #{tpu_custom_call.1} parent=1 // pred_fallthru
      _
    // Predicated region
    $region38: #{tpu_custom_call.1} parent=1 // pred_check
      _
    $region39: #{tpu_custom_call.1} parent=1 // pred_check_branch
      %665 = sbr.rel (0) target = $region41
    $region40: #{tpu_custom_call.1} parent=1 // pred_region
      %667 = dma.done [#allocation10], 1024
    $region41: #{tpu_custom_call.1} parent=1 // pred_fallthru
      _
    %668 = vsyncpa [#allocation3], 1
    %669 = vsyncpa [#allocation6], 1
    %670 = vsyncpa [#allocation4], 1
    %671 = vsyncpa [#allocation10], 1

</llo_original>
